<compile_context>
chip_gen: v5e
topology: v5e:2x2
jax: 0.10.0
libtpu: 0.0.40
codegen_flags: <defaults>
</compile_context>

<pallas_src>
import functools

import jax
import jax.numpy as jnp
from jax import lax
from jax.experimental import pallas as pl
from jax.experimental.pallas import tpu as pltpu

n_embd = 128
num_heads = 4
head_size = n_embd // num_heads  # 32
NEG_INF = float("-inf")


# ---------------------------------------------------------------------------
# Fused kernel: QKV projection + per-head causal softmax attention + head
# concat + output projection, all in VMEM, one pallas_call.
# ---------------------------------------------------------------------------
def fused_mha_kernel(x_ref, wqkv_ref, wo_ref, bo_ref, o_ref):
    Bb, T, C = x_ref.shape            # block of Bb batches
    H, hs = num_heads, head_size
    scale = C ** (-0.5)

    w_qkv = wqkv_ref[...]             # (C, 3*H*hs)
    w_out = wo_ref[...]               # (H*hs, C)
    bias = bo_ref[...]                # (1, C)

    # Causal mask built once, reused for every (batch, head).
    row = lax.broadcasted_iota(jnp.int32, (T, T), 0)
    col = lax.broadcasted_iota(jnp.int32, (T, T), 1)
    causal = row >= col

    # Contract last dim of q_h with last dim of k_h: (T,hs)x(T,hs) -> (T,T).
    qk_dims = (((1,), (1,)), ((), ()))

    for b in range(Bb):               # static unrolled loop (Bb is small)
        x = x_ref[b]                  # (T, C)

        # One wide MXU matmul for all of Q, K, V across every head.
        qkv = jnp.dot(x, w_qkv, preferred_element_type=jnp.float32)  # (T, 3*H*hs)
        q = qkv[:, : H * hs] * scale  # fold the C**-0.5 scale into q
        k = qkv[:, H * hs: 2 * H * hs]
        v = qkv[:, 2 * H * hs:]

        head_outs = []
        for h in range(H):            # static unrolled loop over heads
            sl = slice(h * hs, (h + 1) * hs)
            logits = lax.dot_general(q[:, sl], k[:, sl], qk_dims,
                                     preferred_element_type=jnp.float32)  # (T,T)
            logits = jnp.where(causal, logits, NEG_INF)

            # numerically stable softmax
            m = jnp.max(logits, axis=-1, keepdims=True)
            p = jnp.exp(logits - m)
            denom = jnp.sum(p, axis=-1, keepdims=True)
            wei = p * pl.reciprocal(denom, approx=True)

            head_outs.append(jnp.dot(wei, v[:, sl],
                                     preferred_element_type=jnp.float32))

        # Heads concatenated on the lane axis -> (T, H*hs) = (T, 128),
        # then fused output projection; write lane-dense (T, C) block.
        y = jnp.concatenate(head_outs, axis=-1)
        o_ref[b] = jnp.dot(y, w_out, preferred_element_type=jnp.float32) + bias


@functools.partial(jax.jit, static_argnames=("block_b",))
def multi_head_attention_forward(x, w_qkv, w_out, b_out, *, block_b=1):
    """x: (B,T,C); w_qkv: (C, 3*H*hs); w_out: (H*hs, C); b_out: (1, C)."""
    B, T, C = x.shape
    H, hs = num_heads, head_size
    assert B % block_b == 0, "block_b must divide B"
    grid = (B // block_b,)

    return pl.pallas_call(
        fused_mha_kernel,
        out_shape=jax.ShapeDtypeStruct((B, T, C), jnp.float32),
        grid_spec=pltpu.PrefetchScalarGridSpec(
            num_scalar_prefetch=0,
            grid=grid,
            in_specs=[
                pl.BlockSpec((block_b, T, C), lambda b: (b, 0, 0)),
                pl.BlockSpec((C, 3 * H * hs), lambda b: (0, 0)),
                pl.BlockSpec((H * hs, C), lambda b: (0, 0)),
                pl.BlockSpec((1, C), lambda b: (0, 0)),
            ],
            out_specs=pl.BlockSpec((block_b, T, C), lambda b: (b, 0, 0)),
        ),
        compiler_params=pltpu.CompilerParams(
            dimension_semantics=("parallel",)),
    )(x, w_qkv, w_out, b_out)


def pack_qkv_weights(wq, wk, wv):
    """Per-head weights (H, C, hs) -> packed (C, 3*H*hs): [Q-heads|K-heads|V-heads]."""
    H, C, hs = wq.shape
    to_wide = lambda w: jnp.transpose(w, (1, 0, 2)).reshape(C, H * hs)
    return jnp.concatenate([to_wide(wq), to_wide(wk), to_wide(wv)], axis=-1)


# ---------------------------------------------------------------------------
# Pure-JAX reference (mirrors the PyTorch module exactly, eval mode).
# ---------------------------------------------------------------------------
def reference_forward(x, w_qkv, w_out, b_out):
    B, T, C = x.shape
    H, hs = num_heads, head_size
    qw = w_qkv[:, : H * hs]
    kw = w_qkv[:, H * hs: 2 * H * hs]
    vw = w_qkv[:, 2 * H * hs:]
    outs = []
    for h in range(H):
        sl = slice(h * hs, (h + 1) * hs)
        q = x @ qw[:, sl]
        k = x @ kw[:, sl]
        v = x @ vw[:, sl]
        wei = (q @ jnp.swapaxes(k, 1, 2)) * (C ** (-0.5))
        mask = jnp.tril(jnp.ones((T, T), bool))
        wei = jnp.where(mask, wei, NEG_INF)
        wei = jax.nn.softmax(wei, axis=-1)
        outs.append(wei @ v)
    y = jnp.concatenate(outs, axis=-1)
    return y @ w_out + b_out[0]


if __name__ == "__main__":
    key = jax.random.PRNGKey(0)
    B, T = 2, 8  # T <= max_seq_length

    k_x, k_q, k_k, k_v, k_w, k_b = jax.random.split(key, 6)

    x = jax.random.normal(k_x, (B, T, n_embd), dtype=jnp.float32)

    # Per-head projection weights (H, C, hs), as nn.Linear(n_embd, head_size,
    # bias=False).weight.T per head; then packed into one wide QKV weight.
    scale_in = 1.0 / jnp.sqrt(jnp.float32(n_embd))
    wq = jax.random.uniform(k_q, (num_heads, n_embd, head_size),
                            minval=-scale_in, maxval=scale_in, dtype=jnp.float32)
    wk = jax.random.uniform(k_k, (num_heads, n_embd, head_size),
                            minval=-scale_in, maxval=scale_in, dtype=jnp.float32)
    wv = jax.random.uniform(k_v, (num_heads, n_embd, head_size),
                            minval=-scale_in, maxval=scale_in, dtype=jnp.float32)
    w_qkv = pack_qkv_weights(wq, wk, wv)                       # (128, 384)

    # Output projection nn.Linear(H*hs, n_embd): (in, out) layout + bias.
    scale_out = 1.0 / jnp.sqrt(jnp.float32(num_heads * head_size))
    w_out = jax.random.uniform(k_w, (num_heads * head_size, n_embd),
                               minval=-scale_out, maxval=scale_out,
                               dtype=jnp.float32)
    b_out = jax.random.uniform(k_b, (1, n_embd),
                               minval=-scale_out, maxval=scale_out,
                               dtype=jnp.float32)

    out = multi_head_attention_forward(x, w_qkv, w_out, b_out, block_b=1)
    out = jax.block_until_ready(out)

    ref = reference_forward(x, w_qkv, w_out, b_out)
    assert out.shape == (B, T, n_embd)
    # Tolerance slightly relaxed for pl.reciprocal(approx=True) in the softmax.
    assert jnp.allclose(out, ref, atol=2e-3, rtol=2e-3), "mismatch vs reference"

    print("KERNEL_OK")
</pallas_src>

<mosaic_0001>
module attributes {stable_mosaic.version = 11 : i64} {
  func.func @fused_mha_kernel(%arg0: i32, %arg1: memref<1x8x128xf32, #tpu.memory_space<vmem>>, %arg2: memref<128x384xf32, #tpu.memory_space<vmem>>, %arg3: memref<128x128xf32, #tpu.memory_space<vmem>>, %arg4: memref<1x128xf32, #tpu.memory_space<vmem>>, %arg5: memref<1x8x128xf32, #tpu.memory_space<vmem>>) attributes {dimension_semantics = [#tpu.dimension_semantics<parallel>], iteration_bounds = array<i64: 2>, scalar_prefetch = 0 : i64, scratch_operands = 0 : i64, tpu.core_type = #tpu.core_type<tc>, window_params = [{transform_indices = @transform_0, window_bounds = array<i64: 1, 8, 128>}, {pipeline_mode = #tpu.pipeline_mode<synchronous>, transform_indices = @transform_1, window_bounds = array<i64: 128, 384>}, {pipeline_mode = #tpu.pipeline_mode<synchronous>, transform_indices = @transform_2, window_bounds = array<i64: 128, 128>}, {pipeline_mode = #tpu.pipeline_mode<synchronous>, transform_indices = @transform_3, window_bounds = array<i64: 1, 128>}, {transform_indices = @transform_4, window_bounds = array<i64: 1, 8, 128>}]} {
    %c0 = arith.constant 0 : index
    %c0_0 = arith.constant 0 : index
    %0 = vector.load %arg2[%c0, %c0_0] : memref<128x384xf32, #tpu.memory_space<vmem>>, vector<128x384xf32>
    %c0_1 = arith.constant 0 : index
    %c0_2 = arith.constant 0 : index
    %1 = vector.load %arg3[%c0_1, %c0_2] : memref<128x128xf32, #tpu.memory_space<vmem>>, vector<128x128xf32>
    %c0_3 = arith.constant 0 : index
    %c0_4 = arith.constant 0 : index
    %2 = vector.load %arg4[%c0_3, %c0_4] : memref<1x128xf32, #tpu.memory_space<vmem>>, vector<1x128xf32>
    %3 = tpu.iota {dimensions = array<i32: 0>} : vector<8x8xi32>
    %4 = tpu.iota {dimensions = array<i32: 1>} : vector<8x8xi32>
    %5 = arith.cmpi sge, %3, %4 : vector<8x8xi32>
    %c0_5 = arith.constant 0 : index
    %c0_6 = arith.constant 0 : index
    %c0_7 = arith.constant 0 : index
    %6 = vector.load %arg1[%c0_5, %c0_6, %c0_7] : memref<1x8x128xf32, #tpu.memory_space<vmem>>, vector<1x8x128xf32>
    %7 = vector.shape_cast %6 : vector<1x8x128xf32> to vector<8x128xf32>
    %cst = arith.constant dense<0.000000e+00> : vector<8x384xf32>
    %8 = tpu.matmul %7, %0, %cst {dimension_numbers = #tpu.dot_dimension_numbers<[1], [0], [0], [1], [0, 0, 1, 1], [], []>} : vector<8x128xf32>, vector<128x384xf32>, vector<8x384xf32> -> vector<8x384xf32>
    %9 = vector.extract_strided_slice %8 {offsets = [0, 0], sizes = [8, 128], strides = [1, 1]} : vector<8x384xf32> to vector<8x128xf32>
    %cst_8 = arith.constant 0.0883883461 : f32
    %10 = vector.broadcast %cst_8 : f32 to vector<8x128xf32>
    %11 = arith.mulf %9, %10 : vector<8x128xf32>
    %12 = vector.extract_strided_slice %8 {offsets = [0, 128], sizes = [8, 128], strides = [1, 1]} : vector<8x384xf32> to vector<8x128xf32>
    %13 = vector.extract_strided_slice %8 {offsets = [0, 256], sizes = [8, 128], strides = [1, 1]} : vector<8x384xf32> to vector<8x128xf32>
    %14 = vector.extract_strided_slice %11 {offsets = [0, 0], sizes = [8, 32], strides = [1, 1]} : vector<8x128xf32> to vector<8x32xf32>
    %15 = vector.extract_strided_slice %12 {offsets = [0, 0], sizes = [8, 32], strides = [1, 1]} : vector<8x128xf32> to vector<8x32xf32>
    %cst_9 = arith.constant dense<0.000000e+00> : vector<8x8xf32>
    %16 = tpu.matmul %14, %15, %cst_9 {dimension_numbers = #tpu.dot_dimension_numbers<[1], [1], [0], [0], [0, 0, 1, 0], [], []>} : vector<8x32xf32>, vector<8x32xf32>, vector<8x8xf32> -> vector<8x8xf32>
    %cst_10 = arith.constant 0xFF800000 : f32
    %17 = vector.broadcast %cst_10 : f32 to vector<8x8xf32>
    %18 = arith.select %5, %16, %17 : vector<8x8xi1>, vector<8x8xf32>
    %cst_11 = arith.constant dense<0xFF800000> : vector<8xf32>
    %19 = vector.multi_reduction <maximumf>, %18, %cst_11 [1] : vector<8x8xf32> to vector<8xf32>
    %20 = vector.shape_cast %19 : vector<8xf32> to vector<8x1xf32>
    %21 = vector.broadcast %20 : vector<8x1xf32> to vector<8x8xf32>
    %22 = arith.subf %18, %21 : vector<8x8xf32>
    %23 = math.exp %22 : vector<8x8xf32>
    %cst_12 = arith.constant dense<0.000000e+00> : vector<8xf32>
    %24 = vector.multi_reduction <add>, %23, %cst_12 [1] : vector<8x8xf32> to vector<8xf32>
    %25 = vector.shape_cast %24 : vector<8xf32> to vector<8x1xf32>
    %26 = tpu.reciprocal %25 {approx = true} : vector<8x1xf32> -> vector<8x1xf32>
    %27 = vector.broadcast %26 : vector<8x1xf32> to vector<8x8xf32>
    %28 = arith.mulf %23, %27 : vector<8x8xf32>
    %29 = vector.extract_strided_slice %13 {offsets = [0, 0], sizes = [8, 32], strides = [1, 1]} : vector<8x128xf32> to vector<8x32xf32>
    %cst_13 = arith.constant dense<0.000000e+00> : vector<8x32xf32>
    %30 = tpu.matmul %28, %29, %cst_13 {dimension_numbers = #tpu.dot_dimension_numbers<[1], [0], [0], [1], [0, 0, 1, 1], [], []>} : vector<8x8xf32>, vector<8x32xf32>, vector<8x32xf32> -> vector<8x32xf32>
    %31 = vector.extract_strided_slice %11 {offsets = [0, 32], sizes = [8, 32], strides = [1, 1]} : vector<8x128xf32> to vector<8x32xf32>
    %32 = vector.extract_strided_slice %12 {offsets = [0, 32], sizes = [8, 32], strides = [1, 1]} : vector<8x128xf32> to vector<8x32xf32>
    %cst_14 = arith.constant dense<0.000000e+00> : vector<8x8xf32>
    %33 = tpu.matmul %31, %32, %cst_14 {dimension_numbers = #tpu.dot_dimension_numbers<[1], [1], [0], [0], [0, 0, 1, 0], [], []>} : vector<8x32xf32>, vector<8x32xf32>, vector<8x8xf32> -> vector<8x8xf32>
    %cst_15 = arith.constant 0xFF800000 : f32
    %34 = vector.broadcast %cst_15 : f32 to vector<8x8xf32>
    %35 = arith.select %5, %33, %34 : vector<8x8xi1>, vector<8x8xf32>
    %cst_16 = arith.constant dense<0xFF800000> : vector<8xf32>
    %36 = vector.multi_reduction <maximumf>, %35, %cst_16 [1] : vector<8x8xf32> to vector<8xf32>
    %37 = vector.shape_cast %36 : vector<8xf32> to vector<8x1xf32>
    %38 = vector.broadcast %37 : vector<8x1xf32> to vector<8x8xf32>
    %39 = arith.subf %35, %38 : vector<8x8xf32>
    %40 = math.exp %39 : vector<8x8xf32>
    %cst_17 = arith.constant dense<0.000000e+00> : vector<8xf32>
    %41 = vector.multi_reduction <add>, %40, %cst_17 [1] : vector<8x8xf32> to vector<8xf32>
    %42 = vector.shape_cast %41 : vector<8xf32> to vector<8x1xf32>
    %43 = tpu.reciprocal %42 {approx = true} : vector<8x1xf32> -> vector<8x1xf32>
    %44 = vector.broadcast %43 : vector<8x1xf32> to vector<8x8xf32>
    %45 = arith.mulf %40, %44 : vector<8x8xf32>
    %46 = vector.extract_strided_slice %13 {offsets = [0, 32], sizes = [8, 32], strides = [1, 1]} : vector<8x128xf32> to vector<8x32xf32>
    %cst_18 = arith.constant dense<0.000000e+00> : vector<8x32xf32>
    %47 = tpu.matmul %45, %46, %cst_18 {dimension_numbers = #tpu.dot_dimension_numbers<[1], [0], [0], [1], [0, 0, 1, 1], [], []>} : vector<8x8xf32>, vector<8x32xf32>, vector<8x32xf32> -> vector<8x32xf32>
    %48 = vector.extract_strided_slice %11 {offsets = [0, 64], sizes = [8, 32], strides = [1, 1]} : vector<8x128xf32> to vector<8x32xf32>
    %49 = vector.extract_strided_slice %12 {offsets = [0, 64], sizes = [8, 32], strides = [1, 1]} : vector<8x128xf32> to vector<8x32xf32>
    %cst_19 = arith.constant dense<0.000000e+00> : vector<8x8xf32>
    %50 = tpu.matmul %48, %49, %cst_19 {dimension_numbers = #tpu.dot_dimension_numbers<[1], [1], [0], [0], [0, 0, 1, 0], [], []>} : vector<8x32xf32>, vector<8x32xf32>, vector<8x8xf32> -> vector<8x8xf32>
    %cst_20 = arith.constant 0xFF800000 : f32
    %51 = vector.broadcast %cst_20 : f32 to vector<8x8xf32>
    %52 = arith.select %5, %50, %51 : vector<8x8xi1>, vector<8x8xf32>
    %cst_21 = arith.constant dense<0xFF800000> : vector<8xf32>
    %53 = vector.multi_reduction <maximumf>, %52, %cst_21 [1] : vector<8x8xf32> to vector<8xf32>
    %54 = vector.shape_cast %53 : vector<8xf32> to vector<8x1xf32>
    %55 = vector.broadcast %54 : vector<8x1xf32> to vector<8x8xf32>
    %56 = arith.subf %52, %55 : vector<8x8xf32>
    %57 = math.exp %56 : vector<8x8xf32>
    %cst_22 = arith.constant dense<0.000000e+00> : vector<8xf32>
    %58 = vector.multi_reduction <add>, %57, %cst_22 [1] : vector<8x8xf32> to vector<8xf32>
    %59 = vector.shape_cast %58 : vector<8xf32> to vector<8x1xf32>
    %60 = tpu.reciprocal %59 {approx = true} : vector<8x1xf32> -> vector<8x1xf32>
    %61 = vector.broadcast %60 : vector<8x1xf32> to vector<8x8xf32>
    %62 = arith.mulf %57, %61 : vector<8x8xf32>
    %63 = vector.extract_strided_slice %13 {offsets = [0, 64], sizes = [8, 32], strides = [1, 1]} : vector<8x128xf32> to vector<8x32xf32>
    %cst_23 = arith.constant dense<0.000000e+00> : vector<8x32xf32>
    %64 = tpu.matmul %62, %63, %cst_23 {dimension_numbers = #tpu.dot_dimension_numbers<[1], [0], [0], [1], [0, 0, 1, 1], [], []>} : vector<8x8xf32>, vector<8x32xf32>, vector<8x32xf32> -> vector<8x32xf32>
    %65 = vector.extract_strided_slice %11 {offsets = [0, 96], sizes = [8, 32], strides = [1, 1]} : vector<8x128xf32> to vector<8x32xf32>
    %66 = vector.extract_strided_slice %12 {offsets = [0, 96], sizes = [8, 32], strides = [1, 1]} : vector<8x128xf32> to vector<8x32xf32>
    %cst_24 = arith.constant dense<0.000000e+00> : vector<8x8xf32>
    %67 = tpu.matmul %65, %66, %cst_24 {dimension_numbers = #tpu.dot_dimension_numbers<[1], [1], [0], [0], [0, 0, 1, 0], [], []>} : vector<8x32xf32>, vector<8x32xf32>, vector<8x8xf32> -> vector<8x8xf32>
    %cst_25 = arith.constant 0xFF800000 : f32
    %68 = vector.broadcast %cst_25 : f32 to vector<8x8xf32>
    %69 = arith.select %5, %67, %68 : vector<8x8xi1>, vector<8x8xf32>
    %cst_26 = arith.constant dense<0xFF800000> : vector<8xf32>
    %70 = vector.multi_reduction <maximumf>, %69, %cst_26 [1] : vector<8x8xf32> to vector<8xf32>
    %71 = vector.shape_cast %70 : vector<8xf32> to vector<8x1xf32>
    %72 = vector.broadcast %71 : vector<8x1xf32> to vector<8x8xf32>
    %73 = arith.subf %69, %72 : vector<8x8xf32>
    %74 = math.exp %73 : vector<8x8xf32>
    %cst_27 = arith.constant dense<0.000000e+00> : vector<8xf32>
    %75 = vector.multi_reduction <add>, %74, %cst_27 [1] : vector<8x8xf32> to vector<8xf32>
    %76 = vector.shape_cast %75 : vector<8xf32> to vector<8x1xf32>
    %77 = tpu.reciprocal %76 {approx = true} : vector<8x1xf32> -> vector<8x1xf32>
    %78 = vector.broadcast %77 : vector<8x1xf32> to vector<8x8xf32>
    %79 = arith.mulf %74, %78 : vector<8x8xf32>
    %80 = vector.extract_strided_slice %13 {offsets = [0, 96], sizes = [8, 32], strides = [1, 1]} : vector<8x128xf32> to vector<8x32xf32>
    %cst_28 = arith.constant dense<0.000000e+00> : vector<8x32xf32>
    %81 = tpu.matmul %79, %80, %cst_28 {dimension_numbers = #tpu.dot_dimension_numbers<[1], [0], [0], [1], [0, 0, 1, 1], [], []>} : vector<8x8xf32>, vector<8x32xf32>, vector<8x32xf32> -> vector<8x32xf32>
    %82 = tpu.concatenate %30, %47, %64, %81 in 1 : vector<8x32xf32>, vector<8x32xf32>, vector<8x32xf32>, vector<8x32xf32> -> vector<8x128xf32>
    %cst_29 = arith.constant dense<0.000000e+00> : vector<8x128xf32>
    %83 = tpu.matmul %82, %1, %cst_29 {dimension_numbers = #tpu.dot_dimension_numbers<[1], [0], [0], [1], [0, 0, 1, 1], [], []>} : vector<8x128xf32>, vector<128x128xf32>, vector<8x128xf32> -> vector<8x128xf32>
    %84 = vector.broadcast %2 : vector<1x128xf32> to vector<8x128xf32>
    %85 = arith.addf %83, %84 : vector<8x128xf32>
    %c0_30 = arith.constant 0 : index
    %c0_31 = arith.constant 0 : index
    %c0_32 = arith.constant 0 : index
    %86 = vector.load %arg5[%c0_30, %c0_31, %c0_32] : memref<1x8x128xf32, #tpu.memory_space<vmem>>, vector<1x8x128xf32>
    %87 = vector.shape_cast %86 : vector<1x8x128xf32> to vector<8x128xf32>
    %88 = vector.shape_cast %85 : vector<8x128xf32> to vector<1x8x128xf32>
    tpu.vector_store %arg5[%c0_30, %c0_31, %c0_32], %88 {strides = array<i32>} : memref<1x8x128xf32, #tpu.memory_space<vmem>>, vector<1x8x128xf32>,
    return
  }
  func.func @transform_0(%arg0: i32) -> (i32, i32, i32) {
    %c0_i32 = arith.constant 0 : i32
    %c0_i32_0 = arith.constant 0 : i32
    %c0_i32_1 = arith.constant 0 : i32
    return %arg0, %c0_i32, %c0_i32_0 : i32, i32, i32
  }
  func.func @transform_1(%arg0: i32) -> (i32, i32) {
    %c0_i32 = arith.constant 0 : i32
    %c0_i32_0 = arith.constant 0 : i32
    %c0_i32_1 = arith.constant 0 : i32
    return %c0_i32, %c0_i32_0 : i32, i32
  }
  func.func @transform_2(%arg0: i32) -> (i32, i32) {
    %c0_i32 = arith.constant 0 : i32
    %c0_i32_0 = arith.constant 0 : i32
    %c0_i32_1 = arith.constant 0 : i32
    return %c0_i32, %c0_i32_0 : i32, i32
  }
  func.func @transform_3(%arg0: i32) -> (i32, i32) {
    %c0_i32 = arith.constant 0 : i32
    %c0_i32_0 = arith.constant 0 : i32
    %c0_i32_1 = arith.constant 0 : i32
    return %c0_i32, %c0_i32_0 : i32, i32
  }
  func.func @transform_4(%arg0: i32) -> (i32, i32, i32) {
    %c0_i32 = arith.constant 0 : i32
    %c0_i32_0 = arith.constant 0 : i32
    %c0_i32_1 = arith.constant 0 : i32
    return %arg0, %c0_i32, %c0_i32_0 : i32, i32, i32
  }
}

</mosaic_0001>

<llo_original>
// kernel: multi_head_attention_forward.1
$region0: #{multi_head_attention_forward.1}
  #allocation0 [shape = 'u32[]', space=smem, size = 0x4, offset = 0x4, fixed_abs, tag = 'smem constant byte address 0x4 - core index']
  #allocation1 [shape = 'u32[72,128]{1,0:T(1,128)}', space=vmem, size = 0x9000, scoped, tag = 'internal scratch']
  %s0 = inlined_call_operand.hbm [shape: f32[2,8,128], index: 0, kind: input, shape index: {}]
  %s1 = inlined_call_operand.hbm [shape: f32[128,384], index: 1, kind: input, shape index: {}]
  %s2 = inlined_call_operand.hbm [shape: f32[128,128], index: 2, kind: input, shape index: {}]
  %s3 = inlined_call_operand.vmem [shape: f32[1,128], index: 3, kind: input, shape index: {}]
  %s4 = inlined_call_operand.hbm [shape: f32[2,8,128], index: 4, kind: output, shape index: {}]
  %s5 = sld [smem:[#allocation0]]
  $region61: #{multi_head_attention_forward.1} parent=0
    _
  %s7 = ssub.s32 1, %s5
  %s8 = scalar_select 0, %s7, %s5
  $region1: #{multi_head_attention_forward.1} parent=0
    #allocation2 [shape = 'u8[8192]{0}', space=vmem, size = 0x2000, scoped, tag = 'input window, operand 0']
    #allocation3 [shape = 's32[2]{0}', space=sflag, size = 0x8, scoped, tag = 'scoped memory for multi_head_attention_forward.1']
    #allocation4 [shape = 's32[2]{0}', space=sflag, size = 0x8, scoped, tag = 'scoped memory for multi_head_attention_forward.1']
    #allocation5 [shape = 'u8[196608]{0}', space=vmem, size = 0x30000, scoped, tag = 'input window, operand 1, single buffered']
    #allocation6 [shape = 's32[1]{0}', space=sflag, size = 0x4, scoped, tag = 'scoped memory for multi_head_attention_forward.1']
    #allocation7 [shape = 'u8[65536]{0}', space=vmem, size = 0x10000, scoped, tag = 'input window, operand 2, single buffered']
    #allocation8 [shape = 'u8[8192]{0}', space=vmem, size = 0x2000, scoped, tag = 'output window, operand 0']
    %9 = vsyncpa [#allocation3], 0
    %s10 = scalar_lea.sflag [#allocation3], 1
    %11 = vsyncpa %s10, 0
    %12 = vsyncpa [#allocation6], 0
    %13 = vsyncpa [#allocation4], 0
    %s14 = scalar_lea.sflag [#allocation4], 1
    %15 = vsyncpa %s14, 0
    loop: start=0, step=1, limit=4
    $region2: #{multi_head_attention_forward.1} parent=1 // loop_pre_header
      _
    $region3: #{multi_head_attention_forward.1} parent=1 // loop_header
      %s17 = sphi 0, %s21
      %p18 = scmp.ge.s32.totalorder %s17, 4
      %s27 = sphi 0, %s29
      %s30 = sphi 0, %s27
      %s31 = sphi 0, %s30
      %s47 = sphi 0, %s31
      %s51 = sphi 0, %s51
      %s53 = sphi 0, %s51
      %s54 = sphi 0, %s53
      %s68 = sphi 0, %s54
      %s72 = sphi 0, %s72
      %s74 = sphi 0, %s72
      %s75 = sphi 0, %s74
      %s89 = sphi 0, %s75
      %s93 = sphi 0, %s93
      %s95 = sphi 0, %s93
      %s96 = sphi 0, %s95
      %s110 = sphi 0, %s96
      %s116 = sphi 0, %s118
      %s119 = sphi 0, %s116
      %s120 = sphi 0, %s119
      %s136 = sphi 0, %s120
    $region4: #{multi_head_attention_forward.1} parent=1 // loop_header_branch
      %20 = sbr.rel (%p18) target = $region8
    $region5: #{multi_head_attention_forward.1} parent=1 // loop_body
      %s22 = ssub.s32 %s17, 1
      %s23 = ssub.s32 %s17, 2
      %s24 = sadd.s32 %s17, 1
      %s25 = ssub.s32 %s17, %s24
      %p26 = scmp.eq.s32.totalorder %s25, 0
      %s28 = sadd.s32 %s27, 1
      %s29 = scalar_select %p26, %s27, %s28
      %p32 = pneg %p26
      %p33 = scmp.eq.s32.totalorder %s17, 1
      %p34 = por %p32, %p33
      %p35 = scmp.ne.s32.totalorder %s27, %s30
      %p36 = scmp.eq.s32.totalorder %s17, 0
      %p37 = por %p35, %p36
      %p38 = scmp.ne.s32.totalorder %s27, %s30
      %p39 = scmp.eq.s32.totalorder %s22, 1
      %p40 = por %p38, %p39
      %p41 = scmp.ne.s32.totalorder %s30, %s31
      %p42 = scmp.eq.s32.totalorder %s22, 0
      %p43 = por %p41, %p42
      %p44 = scmp.ne.s32.totalorder %s30, %s31
      %p45 = scmp.eq.s32.totalorder %s23, 1
      %p46 = por %p44, %p45
      %p48 = scmp.ne.s32.totalorder %s31, %s47
      %p49 = scmp.eq.s32.totalorder %s23, 0
      %p50 = por %p48, %p49
      %s52 = sadd.s32 %s51, 1
      %p55 = scmp.eq.s32.totalorder %s17, 1
      %p56 = scmp.ne.s32.totalorder %s51, %s53
      %p57 = scmp.eq.s32.totalorder %s17, 0
      %p58 = por %p56, %p57
      %p59 = scmp.ne.s32.totalorder %s51, %s53
      %p60 = scmp.eq.s32.totalorder %s22, 1
      %p61 = por %p59, %p60
      %p62 = scmp.ne.s32.totalorder %s53, %s54
      %p63 = scmp.eq.s32.totalorder %s22, 0
      %p64 = por %p62, %p63
      %p65 = scmp.ne.s32.totalorder %s53, %s54
      %p66 = scmp.eq.s32.totalorder %s23, 1
      %p67 = por %p65, %p66
      %p69 = scmp.ne.s32.totalorder %s54, %s68
      %p70 = scmp.eq.s32.totalorder %s23, 0
      %p71 = por %p69, %p70
      %s73 = sadd.s32 %s72, 1
      %p76 = scmp.eq.s32.totalorder %s17, 1
      %p77 = scmp.ne.s32.totalorder %s72, %s74
      %p78 = scmp.eq.s32.totalorder %s17, 0
      %p79 = por %p77, %p78
      %p80 = scmp.ne.s32.totalorder %s72, %s74
      %p81 = scmp.eq.s32.totalorder %s22, 1
      %p82 = por %p80, %p81
      %p83 = scmp.ne.s32.totalorder %s74, %s75
      %p84 = scmp.eq.s32.totalorder %s22, 0
      %p85 = por %p83, %p84
      %p86 = scmp.ne.s32.totalorder %s74, %s75
      %p87 = scmp.eq.s32.totalorder %s23, 1
      %p88 = por %p86, %p87
      %p90 = scmp.ne.s32.totalorder %s75, %s89
      %p91 = scmp.eq.s32.totalorder %s23, 0
      %p92 = por %p90, %p91
      %s94 = sadd.s32 %s93, 1
      %p97 = scmp.eq.s32.totalorder %s17, 1
      %p98 = scmp.ne.s32.totalorder %s93, %s95
      %p99 = scmp.eq.s32.totalorder %s17, 0
      %p100 = por %p98, %p99
      %p101 = scmp.ne.s32.totalorder %s93, %s95
      %p102 = scmp.eq.s32.totalorder %s22, 1
      %p103 = por %p101, %p102
      %p104 = scmp.ne.s32.totalorder %s95, %s96
      %p105 = scmp.eq.s32.totalorder %s22, 0
      %p106 = por %p104, %p105
      %p107 = scmp.ne.s32.totalorder %s95, %s96
      %p108 = scmp.eq.s32.totalorder %s23, 1
      %p109 = por %p107, %p108
      %p111 = scmp.ne.s32.totalorder %s96, %s110
      %p112 = scmp.eq.s32.totalorder %s23, 0
      %p113 = por %p111, %p112
      %s114 = ssub.s32 %s17, %s24
      %p115 = scmp.eq.s32.totalorder %s114, 0
      %s117 = sadd.s32 %s116, 1
      %s118 = scalar_select %p115, %s116, %s117
      %p121 = pneg %p115
      %p122 = scmp.eq.s32.totalorder %s17, 1
      %p123 = por %p121, %p122
      %p124 = scmp.ne.s32.totalorder %s116, %s119
      %p125 = scmp.eq.s32.totalorder %s17, 0
      %p126 = por %p124, %p125
      %p127 = scmp.ne.s32.totalorder %s116, %s119
      %p128 = scmp.eq.s32.totalorder %s22, 1
      %p129 = por %p127, %p128
      %p130 = scmp.ne.s32.totalorder %s119, %s120
      %p131 = scmp.eq.s32.totalorder %s22, 0
      %p132 = por %p130, %p131
      %p133 = scmp.ne.s32.totalorder %s119, %s120
      %p134 = scmp.eq.s32.totalorder %s23, 1
      %p135 = por %p133, %p134
      %p137 = scmp.ne.s32.totalorder %s120, %s136
      %p138 = scmp.eq.s32.totalorder %s23, 0
      %p139 = por %p137, %p138
      %p140 = scmp.le.s32.totalorder 1, %s17
      %p141 = scmp.lt.s32.totalorder %s17, 3
      %p142 = pnand %p140, %p141
      %p143 = pneg %p142
      // Predicated region
      $region9: #{multi_head_attention_forward.1} parent=5 // pred_check
        _
      $region10: #{multi_head_attention_forward.1} parent=5 // pred_check_branch
        %145 = sbr.rel (%p142) target = $region12
      $region11: #{multi_head_attention_forward.1} parent=5 // pred_region
        %s146 = ssub.s32 %s17, 1
        // Predicated region
        $region13: #{multi_head_attention_forward.1} parent=11 // pred_check
          %p147 = pneg %p64
        $region14: #{multi_head_attention_forward.1} parent=11 // pred_check_branch
          %149 = sbr.rel (%p147) target = $region16
        $region15: #{multi_head_attention_forward.1} parent=11 // pred_region
          %151 = vsyncadd [#allocation6], 0
          %s152 = sshll.u32 %s1, 4
          %s153 = int_to_ptr.hbm [resolvable:$true] %s152
          %s154 = sshll.u32 [#allocation5], 4
          %s155 = int_to_ptr.vmem [resolvable:$true] %s154
          %160 = dma.hbm_to_vmem [thread:$0]  %s153, 6144, %s155, [#allocation6], 384, 384, 24
        $region16: #{multi_head_attention_forward.1} parent=11 // pred_fallthru
          _
        // Predicated region
        $region17: #{multi_head_attention_forward.1} parent=11 // pred_check
          %p161 = pneg %p85
        $region18: #{multi_head_attention_forward.1} parent=11 // pred_check_branch
          %163 = sbr.rel (%p161) target = $region20
        $region19: #{multi_head_attention_forward.1} parent=11 // pred_region
          %165 = vsyncadd [#allocation6], 0
          %s166 = sshll.u32 %s2, 4
          %s167 = int_to_ptr.hbm [resolvable:$true] %s166
          %s168 = sshll.u32 [#allocation7], 4
          %s169 = int_to_ptr.vmem [resolvable:$true] %s168
          %174 = dma.hbm_to_vmem [thread:$0]  %s167, 2048, %s169, [#allocation6], 128, 128, 8
        $region20: #{multi_head_attention_forward.1} parent=11 // pred_fallthru
          _
        // Predicated region
        $region21: #{multi_head_attention_forward.1} parent=11 // pred_check
          %p175 = pneg %p106
        $region22: #{multi_head_attention_forward.1} parent=11 // pred_check_branch
          %177 = sbr.rel (%p175) target = $region24
        $region23: #{multi_head_attention_forward.1} parent=11 // pred_region
          _
        $region24: #{multi_head_attention_forward.1} parent=11 // pred_fallthru
          _
      $region12: #{multi_head_attention_forward.1} parent=5 // pred_fallthru
        _
      %p178 = scmp.lt.s32.totalorder %s17, 2
      // Predicated region
      $region25: #{multi_head_attention_forward.1} parent=5 // pred_check
        %p179 = pneg %p178
      $region26: #{multi_head_attention_forward.1} parent=5 // pred_check_branch
        %181 = sbr.rel (%p179) target = $region28
      $region27: #{multi_head_attention_forward.1} parent=5 // pred_region
        // Predicated region
        $region29: #{multi_head_attention_forward.1} parent=27 // pred_check
          %p182 = pneg %p37
        $region30: #{multi_head_attention_forward.1} parent=27 // pred_check_branch
          %184 = sbr.rel (%p182) target = $region32
        $region31: #{multi_head_attention_forward.1} parent=27 // pred_region
          %s185 = sand.u32 %s27, 1
          %s186 = scalar_lea.sflag [#allocation3], %s185
          %s187 = sand.u32 %s27, 1
          %s188 = smul.addr %s187, 8
          %s189 = scalar_lea.vmem [#allocation2], %s188
          %191 = vsyncadd %s186, 0
          %s192 = smul.addr %s17, 8
          %s193 = scalar_lea.hbm %s0, %s192
          %s195 = sshll.u32 %s193, 4
          %s196 = int_to_ptr.hbm [resolvable:$true] %s195
          %s197 = sshll.u32 %s189, 4
          %s198 = int_to_ptr.vmem [resolvable:$true] %s197
          %200 = dma.hbm_to_vmem [thread:$0]  %s196, 128, %s198, %s186
        $region32: #{multi_head_attention_forward.1} parent=27 // pred_fallthru
          _
      $region28: #{multi_head_attention_forward.1} parent=5 // pred_fallthru
        _
      %p201 = scmp.le.s32.totalorder 1, %s17
      %p202 = scmp.lt.s32.totalorder %s17, 3
      %p203 = pnand %p201, %p202
      %p204 = pneg %p203
      // Predicated region
      $region33: #{multi_head_attention_forward.1} parent=5 // pred_check
        _
      $region34: #{multi_head_attention_forward.1} parent=5 // pred_check_branch
        %206 = sbr.rel (%p203) target = $region36
      $region35: #{multi_head_attention_forward.1} parent=5 // pred_region
        %s207 = ssub.s32 %s17, 1
        %s208 = sand.u32 %s30, 1
        %s209 = scalar_lea.sflag [#allocation3], %s208
        %s210 = sand.u32 %s30, 1
        %s211 = smul.addr %s210, 8
        %s212 = scalar_lea.vmem [#allocation2], %s211
        // Predicated region
        $region37: #{multi_head_attention_forward.1} parent=35 // pred_check
          %p213 = pneg %p43
        $region38: #{multi_head_attention_forward.1} parent=35 // pred_check_branch
          %215 = sbr.rel (%p213) target = $region40
        $region39: #{multi_head_attention_forward.1} parent=35 // pred_region
          %217 = dma.done %s209, 128
        $region40: #{multi_head_attention_forward.1} parent=35 // pred_fallthru
          _
        // Predicated region
        $region41: #{multi_head_attention_forward.1} parent=35 // pred_check
          %p218 = pneg %p64
        $region42: #{multi_head_attention_forward.1} parent=35 // pred_check_branch
          %220 = sbr.rel (%p218) target = $region44
        $region43: #{multi_head_attention_forward.1} parent=35 // pred_region
          %222 = dma.done [#allocation6], 6144
        $region44: #{multi_head_attention_forward.1} parent=35 // pred_fallthru
          _
        // Predicated region
        $region45: #{multi_head_attention_forward.1} parent=35 // pred_check
          %p223 = pneg %p85
        $region46: #{multi_head_attention_forward.1} parent=35 // pred_check_branch
          %225 = sbr.rel (%p223) target = $region48
        $region47: #{multi_head_attention_forward.1} parent=35 // pred_region
          %227 = dma.done [#allocation6], 2048
        $region48: #{multi_head_attention_forward.1} parent=35 // pred_fallthru
          _
        %s228 = sand.u32 %s30, 1
        %s229 = scalar_lea.sflag [#allocation3], %s228
        %s230 = sand.u32 %s30, 1
        %s231 = smul.addr %s230, 8
        %s232 = scalar_lea.vmem [#allocation2], %s231
        %p233 = pneg %p43
        %p234 = pneg %p40
        %p235 = pneg %p64
        %p236 = pneg %p61
        %p237 = pneg %p85
        %p238 = pneg %p82
        %p239 = pneg %p106
        %p240 = pneg %p103
        %p241 = pneg %p132
        %p242 = pneg %p129
        %s243 = sand.u32 %s119, 1
        %s244 = scalar_lea.sflag [#allocation4], %s243
        %s245 = sand.u32 %s119, 1
        %s246 = smul.addr %s245, 8
        %s247 = scalar_lea.vmem [#allocation8], %s246
        %v248 = vld [vmem:[#allocation5] sm:$0xff]
        %v249 = vld [vmem:[#allocation5 + $0x8] sm:$0xff]
        %v250 = vld [vmem:[#allocation5 + $0x10] sm:$0xff]
        %v251 = vld [vmem:[#allocation5 + $0x18] sm:$0xff]
        %v252 = vld [vmem:[#allocation5 + $0x20] sm:$0xff]
        %v253 = vld [vmem:[#allocation5 + $0x28] sm:$0xff]
        %v254 = vld [vmem:[#allocation5 + $0x30] sm:$0xff]
        %v255 = vld [vmem:[#allocation5 + $0x38] sm:$0xff]
        %v256 = vld [vmem:[#allocation5 + $0x40] sm:$0xff]
        %v257 = vld [vmem:[#allocation5 + $0x48] sm:$0xff]
        %v258 = vld [vmem:[#allocation5 + $0x50] sm:$0xff]
        %v259 = vld [vmem:[#allocation5 + $0x58] sm:$0xff]
        %v260 = vld [vmem:[#allocation5 + $0x60] sm:$0xff]
        %v261 = vld [vmem:[#allocation5 + $0x68] sm:$0xff]
        %v262 = vld [vmem:[#allocation5 + $0x70] sm:$0xff]
        %v263 = vld [vmem:[#allocation5 + $0x78] sm:$0xff]
        %v264 = vld [vmem:[#allocation5 + $0x80] sm:$0xff]
        %v265 = vld [vmem:[#allocation5 + $0x88] sm:$0xff]
        %v266 = vld [vmem:[#allocation5 + $0x90] sm:$0xff]
        %v267 = vld [vmem:[#allocation5 + $0x98] sm:$0xff]
        %v268 = vld [vmem:[#allocation5 + $0xa0] sm:$0xff]
        %v269 = vld [vmem:[#allocation5 + $0xa8] sm:$0xff]
        %v270 = vld [vmem:[#allocation5 + $0xb0] sm:$0xff]
        %v271 = vld [vmem:[#allocation5 + $0xb8] sm:$0xff]
        %v272 = vld [vmem:[#allocation5 + $0xc0] sm:$0xff]
        %v273 = vld [vmem:[#allocation5 + $0xc8] sm:$0xff]
        %v274 = vld [vmem:[#allocation5 + $0xd0] sm:$0xff]
        %v275 = vld [vmem:[#allocation5 + $0xd8] sm:$0xff]
        %v276 = vld [vmem:[#allocation5 + $0xe0] sm:$0xff]
        %v277 = vld [vmem:[#allocation5 + $0xe8] sm:$0xff]
        %v278 = vld [vmem:[#allocation5 + $0xf0] sm:$0xff]
        %v279 = vld [vmem:[#allocation5 + $0xf8] sm:$0xff]
        %v280 = vld [vmem:[#allocation5 + $0x100] sm:$0xff]
        %v281 = vld [vmem:[#allocation5 + $0x108] sm:$0xff]
        %v282 = vld [vmem:[#allocation5 + $0x110] sm:$0xff]
        %v283 = vld [vmem:[#allocation5 + $0x118] sm:$0xff]
        %v284 = vld [vmem:[#allocation5 + $0x120] sm:$0xff]
        %v285 = vld [vmem:[#allocation5 + $0x128] sm:$0xff]
        %v286 = vld [vmem:[#allocation5 + $0x130] sm:$0xff]
        %v287 = vld [vmem:[#allocation5 + $0x138] sm:$0xff]
        %v288 = vld [vmem:[#allocation5 + $0x140] sm:$0xff]
        %v289 = vld [vmem:[#allocation5 + $0x148] sm:$0xff]
        %v290 = vld [vmem:[#allocation5 + $0x150] sm:$0xff]
        %v291 = vld [vmem:[#allocation5 + $0x158] sm:$0xff]
        %v292 = vld [vmem:[#allocation5 + $0x160] sm:$0xff]
        %v293 = vld [vmem:[#allocation5 + $0x168] sm:$0xff]
        %v294 = vld [vmem:[#allocation5 + $0x170] sm:$0xff]
        %v295 = vld [vmem:[#allocation5 + $0x178] sm:$0xff]
        %v296 = vld [vmem:[#allocation7] sm:$0xff]
        %v297 = vld [vmem:[#allocation7 + $0x8] sm:$0xff]
        %v298 = vld [vmem:[#allocation7 + $0x10] sm:$0xff]
        %v299 = vld [vmem:[#allocation7 + $0x18] sm:$0xff]
        %v300 = vld [vmem:[#allocation7 + $0x20] sm:$0xff]
        %v301 = vld [vmem:[#allocation7 + $0x28] sm:$0xff]
        %v302 = vld [vmem:[#allocation7 + $0x30] sm:$0xff]
        %v303 = vld [vmem:[#allocation7 + $0x38] sm:$0xff]
        %v304 = vld [vmem:[#allocation7 + $0x40] sm:$0xff]
        %v305 = vld [vmem:[#allocation7 + $0x48] sm:$0xff]
        %v306 = vld [vmem:[#allocation7 + $0x50] sm:$0xff]
        %v307 = vld [vmem:[#allocation7 + $0x58] sm:$0xff]
        %v308 = vld [vmem:[#allocation7 + $0x60] sm:$0xff]
        %v309 = vld [vmem:[#allocation7 + $0x68] sm:$0xff]
        %v310 = vld [vmem:[#allocation7 + $0x70] sm:$0xff]
        %v311 = vld [vmem:[#allocation7 + $0x78] sm:$0xff]
        %v312 = vld [vmem:[%s3] sm:$0x1]
        %v313 = vlaneseq
        %v314 = vshrl.u32 %v313, 7
        %v315 = vlaneseq
        %v316 = vand.u32 %v315, 127
        %vm317 = vcmp.ge.s32.totalorder %v314, %v316
        %v318 = vld [vmem:[%s212] sm:$0xff]
        %319 = vmatpush.msra.mxu0 %v293
        %320 = vmatpush.msra.mxu0 %v290
        %321 = vmatpush.msra.mxu0 %v287
        %322 = vmatpush.msra.mxu0 %v284
        %323 = vmatpush.msra.mxu0 %v281
        %324 = vmatpush.msra.mxu0 %v278
        %325 = vmatpush.msra.mxu0 %v275
        %326 = vmatpush.msra.mxu0 %v272
        %327 = vmatpush.msra.mxu0 %v269
        %328 = vmatpush.msra.mxu0 %v266
        %329 = vmatpush.msra.mxu0 %v263
        %330 = vmatpush.msra.mxu0 %v260
        %331 = vmatpush.msra.mxu0 %v257
        %332 = vmatpush.msra.mxu0 %v254
        %333 = vmatpush.msra.mxu0 %v251
        %334 = vmatpush.msra.mxu0 %v248
        %335 = vmatmul.f32.gmra.mxu0 %v318
        %v336 = vpop.f32.mrf.mxu0
        %v337 = vadd.f32 0.0, %v336
        %338 = vdwg.mxu0
        %339 = vmatpush.msra.mxu0 %v294
        %340 = vmatpush.msra.mxu0 %v291
        %341 = vmatpush.msra.mxu0 %v288
        %342 = vmatpush.msra.mxu0 %v285
        %343 = vmatpush.msra.mxu0 %v282
        %344 = vmatpush.msra.mxu0 %v279
        %345 = vmatpush.msra.mxu0 %v276
        %346 = vmatpush.msra.mxu0 %v273
        %347 = vmatpush.msra.mxu0 %v270
        %348 = vmatpush.msra.mxu0 %v267
        %349 = vmatpush.msra.mxu0 %v264
        %350 = vmatpush.msra.mxu0 %v261
        %351 = vmatpush.msra.mxu0 %v258
        %352 = vmatpush.msra.mxu0 %v255
        %353 = vmatpush.msra.mxu0 %v252
        %354 = vmatpush.msra.mxu0 %v249
        %355 = vmatmul.f32.gmra.mxu0 %v318
        %v356 = vpop.f32.mrf.mxu0
        %v357 = vadd.f32 0.0, %v356
        %358 = vdwg.mxu0
        %359 = vmatpush.msra.mxu0 %v295
        %360 = vmatpush.msra.mxu0 %v292
        %361 = vmatpush.msra.mxu0 %v289
        %362 = vmatpush.msra.mxu0 %v286
        %363 = vmatpush.msra.mxu0 %v283
        %364 = vmatpush.msra.mxu0 %v280
        %365 = vmatpush.msra.mxu0 %v277
        %366 = vmatpush.msra.mxu0 %v274
        %367 = vmatpush.msra.mxu0 %v271
        %368 = vmatpush.msra.mxu0 %v268
        %369 = vmatpush.msra.mxu0 %v265
        %370 = vmatpush.msra.mxu0 %v262
        %371 = vmatpush.msra.mxu0 %v259
        %372 = vmatpush.msra.mxu0 %v256
        %373 = vmatpush.msra.mxu0 %v253
        %374 = vmatpush.msra.mxu0 %v250
        %375 = vmatmul.f32.gmra.mxu0 %v318
        %v376 = vpop.f32.mrf.mxu0
        %v377 = vadd.f32 0.0, %v376
        %378 = vdwg.mxu0
        %v379 = vmul.f32 %v337, 0.088388346
        %vm380 = vcmask 261120
        %v382 = vsel %vm380, %v379, 0
        %v385 = vsel %vm380, %v357, 0
        %387 = vmatpush.xpose.msra.mxu0 0.0
        %388 = vmatpush.xpose.msra.mxu0 0.0
        %389 = vmatpush.xpose.msra.mxu0 0.0
        %390 = vmatpush.xpose.msra.mxu0 0.0
        %391 = vmatpush.xpose.msra.mxu0 0.0
        %392 = vmatpush.xpose.msra.mxu0 0.0
        %393 = vmatpush.xpose.msra.mxu0 0.0
        %394 = vmatpush.xpose.msra.mxu0 0.0
        %395 = vmatpush.xpose.msra.mxu0 0.0
        %396 = vmatpush.xpose.msra.mxu0 0.0
        %397 = vmatpush.xpose.msra.mxu0 0.0
        %398 = vmatpush.xpose.msra.mxu0 0.0
        %399 = vmatpush.xpose.msra.mxu0 0.0
        %400 = vmatpush.xpose.msra.mxu0 0.0
        %401 = vmatpush.xpose.msra.mxu0 0.0
        %402 = vmatpush.xpose.msra.mxu0 %v385
        %403 = vmatmul.f32.gmra.mxu0 %v382
        %v404 = vpop.f32.mrf.mxu0
        %v405 = vadd.f32 0.0, %v404
        %406 = vdwg.mxu0
        %v407 = vsel %vm317, %v405, -inf
        %vm408 = vcmask 64512
        %v409 = vsel %vm408, %v407, -inf
        %410 = vmax.xlane.f32.xlu0 %v409
        %v411 = vpop.xlane.xlu0 %410
        %v412 = vsub.f32 %v407, %v411
        %v413 = vmul.f32 %v412, 1.442695
        %v414 = vpow.pop %v413
        %v415 = vsel %vm408, %v414, 0.0
        %416 = vadd.xlane.f32.xlu0 %v415
        %v417 = vpop.xlane.xlu0 %416
        %v418 = vrcp.pop %v417
        %v419 = vmul.f32 %v414, %v418
        %v421 = vsel %vm408, %v419, 0
        %423 = vmatpush.msra.mxu0 0.0
        %424 = vmatpush.msra.mxu0 0.0
        %425 = vmatpush.msra.mxu0 0.0
        %426 = vmatpush.msra.mxu0 0.0
        %427 = vmatpush.msra.mxu0 0.0
        %428 = vmatpush.msra.mxu0 0.0
        %429 = vmatpush.msra.mxu0 0.0
        %430 = vmatpush.msra.mxu0 0.0
        %431 = vmatpush.msra.mxu0 0.0
        %432 = vmatpush.msra.mxu0 0.0
        %433 = vmatpush.msra.mxu0 0.0
        %434 = vmatpush.msra.mxu0 0.0
        %435 = vmatpush.msra.mxu0 0.0
        %436 = vmatpush.msra.mxu0 0.0
        %437 = vmatpush.msra.mxu0 0.0
        %438 = vmatpush.msra.mxu0 %v377
        %439 = vmatmul.f32.gmra.mxu0 %v421
        %v440 = vpop.f32.mrf.mxu0
        %v441 = vadd.f32 0.0, %v440
        %442 = vdwg.mxu0
        %443 = vrot.lane.b32.xlu0 %v379, 96
        %v444 = vpop.permute.xlu0 %443
        %445 = vrot.lane.b32.xlu0 %v357, 96
        %v446 = vpop.permute.xlu0 %445
        %v447 = vsel %vm380, %v444, 0
        %v449 = vsel %vm380, %v446, 0
        %451 = vmatpush.xpose.msra.mxu0 0.0
        %452 = vmatpush.xpose.msra.mxu0 0.0
        %453 = vmatpush.xpose.msra.mxu0 0.0
        %454 = vmatpush.xpose.msra.mxu0 0.0
        %455 = vmatpush.xpose.msra.mxu0 0.0
        %456 = vmatpush.xpose.msra.mxu0 0.0
        %457 = vmatpush.xpose.msra.mxu0 0.0
        %458 = vmatpush.xpose.msra.mxu0 0.0
        %459 = vmatpush.xpose.msra.mxu0 0.0
        %460 = vmatpush.xpose.msra.mxu0 0.0
        %461 = vmatpush.xpose.msra.mxu0 0.0
        %462 = vmatpush.xpose.msra.mxu0 0.0
        %463 = vmatpush.xpose.msra.mxu0 0.0
        %464 = vmatpush.xpose.msra.mxu0 0.0
        %465 = vmatpush.xpose.msra.mxu0 0.0
        %466 = vmatpush.xpose.msra.mxu0 %v449
        %467 = vmatmul.f32.gmra.mxu0 %v447
        %v468 = vpop.f32.mrf.mxu0
        %v469 = vadd.f32 0.0, %v468
        %470 = vdwg.mxu0
        %v471 = vsel %vm317, %v469, -inf
        %v472 = vsel %vm408, %v471, -inf
        %473 = vmax.xlane.f32.xlu0 %v472
        %v474 = vpop.xlane.xlu0 %473
        %v475 = vsub.f32 %v471, %v474
        %v476 = vmul.f32 %v475, 1.442695
        %v477 = vpow.pop %v476
        %v478 = vsel %vm408, %v477, 0.0
        %479 = vadd.xlane.f32.xlu0 %v478
        %v480 = vpop.xlane.xlu0 %479
        %v481 = vrcp.pop %v480
        %v482 = vmul.f32 %v477, %v481
        %484 = vrot.lane.b32.xlu0 %v377, 96
        %v485 = vpop.permute.xlu0 %484
        %v488 = vsel %vm408, %v482, 0
        %490 = vmatpush.msra.mxu0 0.0
        %491 = vmatpush.msra.mxu0 0.0
        %492 = vmatpush.msra.mxu0 0.0
        %493 = vmatpush.msra.mxu0 0.0
        %494 = vmatpush.msra.mxu0 0.0
        %495 = vmatpush.msra.mxu0 0.0
        %496 = vmatpush.msra.mxu0 0.0
        %497 = vmatpush.msra.mxu0 0.0
        %498 = vmatpush.msra.mxu0 0.0
        %499 = vmatpush.msra.mxu0 0.0
        %500 = vmatpush.msra.mxu0 0.0
        %501 = vmatpush.msra.mxu0 0.0
        %502 = vmatpush.msra.mxu0 0.0
        %503 = vmatpush.msra.mxu0 0.0
        %504 = vmatpush.msra.mxu0 0.0
        %505 = vmatpush.msra.mxu0 %v485
        %506 = vmatmul.f32.gmra.mxu0 %v488
        %v507 = vpop.f32.mrf.mxu0
        %v508 = vadd.f32 0.0, %v507
        %509 = vdwg.mxu0
        %510 = vrot.lane.b32.xlu0 %v379, 64
        %v511 = vpop.permute.xlu0 %510
        %512 = vrot.lane.b32.xlu0 %v357, 64
        %v513 = vpop.permute.xlu0 %512
        %v514 = vsel %vm380, %v511, 0
        %v516 = vsel %vm380, %v513, 0
        %518 = vmatpush.xpose.msra.mxu0 0.0
        %519 = vmatpush.xpose.msra.mxu0 0.0
        %520 = vmatpush.xpose.msra.mxu0 0.0
        %521 = vmatpush.xpose.msra.mxu0 0.0
        %522 = vmatpush.xpose.msra.mxu0 0.0
        %523 = vmatpush.xpose.msra.mxu0 0.0
        %524 = vmatpush.xpose.msra.mxu0 0.0
        %525 = vmatpush.xpose.msra.mxu0 0.0
        %526 = vmatpush.xpose.msra.mxu0 0.0
        %527 = vmatpush.xpose.msra.mxu0 0.0
        %528 = vmatpush.xpose.msra.mxu0 0.0
        %529 = vmatpush.xpose.msra.mxu0 0.0
        %530 = vmatpush.xpose.msra.mxu0 0.0
        %531 = vmatpush.xpose.msra.mxu0 0.0
        %532 = vmatpush.xpose.msra.mxu0 0.0
        %533 = vmatpush.xpose.msra.mxu0 %v516
        %534 = vmatmul.f32.gmra.mxu0 %v514
        %v535 = vpop.f32.mrf.mxu0
        %v536 = vadd.f32 0.0, %v535
        %537 = vdwg.mxu0
        %v538 = vsel %vm317, %v536, -inf
        %v539 = vsel %vm408, %v538, -inf
        %540 = vmax.xlane.f32.xlu0 %v539
        %v541 = vpop.xlane.xlu0 %540
        %v542 = vsub.f32 %v538, %v541
        %v543 = vmul.f32 %v542, 1.442695
        %v544 = vpow.pop %v543
        %v545 = vsel %vm408, %v544, 0.0
        %546 = vadd.xlane.f32.xlu0 %v545
        %v547 = vpop.xlane.xlu0 %546
        %v548 = vrcp.pop %v547
        %v549 = vmul.f32 %v544, %v548
        %550 = vrot.lane.b32.xlu0 %v377, 64
        %v551 = vpop.permute.xlu0 %550
        %v554 = vsel %vm408, %v549, 0
        %556 = vmatpush.msra.mxu0 0.0
        %557 = vmatpush.msra.mxu0 0.0
        %558 = vmatpush.msra.mxu0 0.0
        %559 = vmatpush.msra.mxu0 0.0
        %560 = vmatpush.msra.mxu0 0.0
        %561 = vmatpush.msra.mxu0 0.0
        %562 = vmatpush.msra.mxu0 0.0
        %563 = vmatpush.msra.mxu0 0.0
        %564 = vmatpush.msra.mxu0 0.0
        %565 = vmatpush.msra.mxu0 0.0
        %566 = vmatpush.msra.mxu0 0.0
        %567 = vmatpush.msra.mxu0 0.0
        %568 = vmatpush.msra.mxu0 0.0
        %569 = vmatpush.msra.mxu0 0.0
        %570 = vmatpush.msra.mxu0 0.0
        %571 = vmatpush.msra.mxu0 %v551
        %572 = vmatmul.f32.gmra.mxu0 %v554
        %v573 = vpop.f32.mrf.mxu0
        %v574 = vadd.f32 0.0, %v573
        %575 = vdwg.mxu0
        %576 = vrot.lane.b32.xlu0 %v379, 32
        %v577 = vpop.permute.xlu0 %576
        %578 = vrot.lane.b32.xlu0 %v357, 32
        %v579 = vpop.permute.xlu0 %578
        %v580 = vsel %vm380, %v577, 0
        %v582 = vsel %vm380, %v579, 0
        %584 = vmatpush.xpose.msra.mxu0 0.0
        %585 = vmatpush.xpose.msra.mxu0 0.0
        %586 = vmatpush.xpose.msra.mxu0 0.0
        %587 = vmatpush.xpose.msra.mxu0 0.0
        %588 = vmatpush.xpose.msra.mxu0 0.0
        %589 = vmatpush.xpose.msra.mxu0 0.0
        %590 = vmatpush.xpose.msra.mxu0 0.0
        %591 = vmatpush.xpose.msra.mxu0 0.0
        %592 = vmatpush.xpose.msra.mxu0 0.0
        %593 = vmatpush.xpose.msra.mxu0 0.0
        %594 = vmatpush.xpose.msra.mxu0 0.0
        %595 = vmatpush.xpose.msra.mxu0 0.0
        %596 = vmatpush.xpose.msra.mxu0 0.0
        %597 = vmatpush.xpose.msra.mxu0 0.0
        %598 = vmatpush.xpose.msra.mxu0 0.0
        %599 = vmatpush.xpose.msra.mxu0 %v582
        %600 = vmatmul.f32.gmra.mxu0 %v580
        %v601 = vpop.f32.mrf.mxu0
        %v602 = vadd.f32 0.0, %v601
        %603 = vdwg.mxu0
        %v604 = vsel %vm317, %v602, -inf
        %v605 = vsel %vm408, %v604, -inf
        %606 = vmax.xlane.f32.xlu0 %v605
        %v607 = vpop.xlane.xlu0 %606
        %v608 = vsub.f32 %v604, %v607
        %v609 = vmul.f32 %v608, 1.442695
        %v610 = vpow.pop %v609
        %v611 = vsel %vm408, %v610, 0.0
        %612 = vadd.xlane.f32.xlu0 %v611
        %v613 = vpop.xlane.xlu0 %612
        %v614 = vrcp.pop %v613
        %v615 = vmul.f32 %v610, %v614
        %616 = vrot.lane.b32.xlu0 %v377, 32
        %v617 = vpop.permute.xlu0 %616
        %v620 = vsel %vm408, %v615, 0
        %622 = vmatpush.msra.mxu0 0.0
        %623 = vmatpush.msra.mxu0 0.0
        %624 = vmatpush.msra.mxu0 0.0
        %625 = vmatpush.msra.mxu0 0.0
        %626 = vmatpush.msra.mxu0 0.0
        %627 = vmatpush.msra.mxu0 0.0
        %628 = vmatpush.msra.mxu0 0.0
        %629 = vmatpush.msra.mxu0 0.0
        %630 = vmatpush.msra.mxu0 0.0
        %631 = vmatpush.msra.mxu0 0.0
        %632 = vmatpush.msra.mxu0 0.0
        %633 = vmatpush.msra.mxu0 0.0
        %634 = vmatpush.msra.mxu0 0.0
        %635 = vmatpush.msra.mxu0 0.0
        %636 = vmatpush.msra.mxu0 0.0
        %637 = vmatpush.msra.mxu0 %v617
        %638 = vmatmul.f32.gmra.mxu0 %v620
        %v639 = vpop.f32.mrf.mxu0
        %v640 = vadd.f32 0.0, %v639
        %641 = vdwg.mxu0
        %643 = vrot.lane.b32.xlu0 %v508, 32
        %v644 = vpop.permute.xlu0 %643
        %647 = vrot.lane.b32.xlu0 %v574, 64
        %v648 = vpop.permute.xlu0 %647
        %651 = vrot.lane.b32.xlu0 %v640, 96
        %v652 = vpop.permute.xlu0 %651
        %v654 = vsel %vm380, %v441, %v644
        %vm655 = vcmask 523264
        %v656 = vsel %vm655, %v654, %v648
        %vm657 = vcmask 785408
        %v658 = vsel %vm657, %v656, %v652
        %v660 = vperm.slane %v312, 0
        %662 = vmatpush.msra.mxu0 %v311
        %663 = vmatpush.msra.mxu0 %v310
        %664 = vmatpush.msra.mxu0 %v309
        %665 = vmatpush.msra.mxu0 %v308
        %666 = vmatpush.msra.mxu0 %v307
        %667 = vmatpush.msra.mxu0 %v306
        %668 = vmatpush.msra.mxu0 %v305
        %669 = vmatpush.msra.mxu0 %v304
        %670 = vmatpush.msra.mxu0 %v303
        %671 = vmatpush.msra.mxu0 %v302
        %672 = vmatpush.msra.mxu0 %v301
        %673 = vmatpush.msra.mxu0 %v300
        %674 = vmatpush.msra.mxu0 %v299
        %675 = vmatpush.msra.mxu0 %v298
        %676 = vmatpush.msra.mxu0 %v297
        %677 = vmatpush.msra.mxu0 %v296
        %678 = vmatmul.f32.gmra.mxu0 %v658
        %v679 = vpop.f32.mrf.mxu0
        %v680 = vadd.f32 %v660, %v679
        %681 = vdwg.mxu0
        %682 = vst [vmem:[%s247] sm:$0xff] %v680
        %s683 = sand.u32 %s119, 1
        %s684 = scalar_lea.sflag [#allocation4], %s683
        %s685 = sand.u32 %s119, 1
        %s686 = smul.addr %s685, 8
        %s687 = scalar_lea.vmem [#allocation8], %s686
        // Predicated region
        $region49: #{multi_head_attention_forward.1} parent=35 // pred_check
          %p688 = pneg %p129
        $region50: #{multi_head_attention_forward.1} parent=35 // pred_check_branch
          %690 = sbr.rel (%p688) target = $region52
        $region51: #{multi_head_attention_forward.1} parent=35 // pred_region
          %692 = vsyncadd %s684, 0
          %s693 = smul.addr %s22, 8
          %s694 = scalar_lea.hbm %s4, %s693
          %s696 = sshll.u32 %s687, 4
          %s697 = int_to_ptr.vmem [resolvable:$true] %s696
          %s698 = sshll.u32 %s694, 4
          %s699 = int_to_ptr.hbm [resolvable:$true] %s698
          %701 = dma.vmem_to_hbm [thread:$0]  %s697, 128, %s699, %s684
        $region52: #{multi_head_attention_forward.1} parent=35 // pred_fallthru
          _
      $region36: #{multi_head_attention_forward.1} parent=5 // pred_fallthru
        _
      %p702 = scmp.le.s32.totalorder 2, %s17
      // Predicated region
      $region53: #{multi_head_attention_forward.1} parent=5 // pred_check
        %p703 = pneg %p702
      $region54: #{multi_head_attention_forward.1} parent=5 // pred_check_branch
        %705 = sbr.rel (%p703) target = $region56
      $region55: #{multi_head_attention_forward.1} parent=5 // pred_region
        %s706 = ssub.s32 %s17, 2
        // Predicated region
        $region57: #{multi_head_attention_forward.1} parent=55 // pred_check
          %p707 = pneg %p135
        $region58: #{multi_head_attention_forward.1} parent=55 // pred_check_branch
          %709 = sbr.rel (%p707) target = $region60
        $region59: #{multi_head_attention_forward.1} parent=55 // pred_region
          %s710 = sand.u32 %s120, 1
          %s711 = scalar_lea.sflag [#allocation4], %s710
          %s712 = sand.u32 %s120, 1
          %s713 = smul.addr %s712, 8
          %s714 = scalar_lea.vmem [#allocation8], %s713
          %716 = dma.done %s711, 128
        $region60: #{multi_head_attention_forward.1} parent=55 // pred_fallthru
          _
      $region56: #{multi_head_attention_forward.1} parent=5 // pred_fallthru
        _
    $region6: #{multi_head_attention_forward.1} parent=1 // loop_footer
      %s21 = sadd.s32 1, %s17
    $region7: #{multi_head_attention_forward.1} parent=1 // loop_footer_branch
      %16 = sbr.rel target = $region3
    $region8: #{multi_head_attention_forward.1} parent=1 // loop_exit
      _
    %717 = vsyncpa [#allocation3], 1
    %s718 = scalar_lea.sflag [#allocation3], 1
    %719 = vsyncpa %s718, 1
    %720 = vsyncpa [#allocation6], 1
    %721 = vsyncpa [#allocation4], 1
    %s722 = scalar_lea.sflag [#allocation4], 1
    %723 = vsyncpa %s722, 1

</llo_original>
